<compile_context>
chip_gen: v7x
topology: tpu7x:2x2x1
jax: 0.10.0
libtpu: 0.0.40
codegen_flags: <defaults>
</compile_context>

<pallas_src>
import functools

import jax
import jax.numpy as jnp
import numpy as np
from jax.experimental import pallas as pl
from jax.experimental.pallas import tpu as pltpu


def _round_up(x, m):
    return (x + m - 1) // m * m


_K_SINGLE_TILE_MAX = 2048  # every layer in this model has K <= 1152


# ----------------------------------------------------------------------------
# Fused matmul kernels:  out = [relu]( (A @ B) * scale + bias [+ residual] )
# Operands feed the MXU (bf16 by default, f32 for the FC head); accumulation
# and the whole epilogue are f32.
# ----------------------------------------------------------------------------
def _mm_fused_1k_kernel(*refs, relu, has_res):
    """Single-K-pass variant: no accumulator scratch, no pl.when phases."""
    if has_res:
        a_ref, b_ref, s_ref, bi_ref, r_ref, o_ref = refs
    else:
        a_ref, b_ref, s_ref, bi_ref, o_ref = refs
        r_ref = None
    y = jnp.dot(a_ref[...], b_ref[...], preferred_element_type=jnp.float32)
    y = y * s_ref[...] + bi_ref[...]
    if r_ref is not None:
        y = y + r_ref[...].astype(jnp.float32)
    if relu:
        y = jnp.maximum(y, 0.0)
    o_ref[...] = y.astype(o_ref.dtype)


def _mm_fused_kernel(*refs, relu, has_res):
    """General K-tiled fallback (only used when K exceeds one tile)."""
    if has_res:
        a_ref, b_ref, s_ref, bi_ref, r_ref, o_ref, acc_ref = refs
    else:
        a_ref, b_ref, s_ref, bi_ref, o_ref, acc_ref = refs
        r_ref = None

    k = pl.program_id(2)

    @pl.when(k == 0)
    def _():
        acc_ref[...] = jnp.zeros_like(acc_ref)

    acc_ref[...] += jnp.dot(a_ref[...], b_ref[...],
                            preferred_element_type=jnp.float32)

    @pl.when(k == pl.num_programs(2) - 1)
    def _():
        y = acc_ref[...] * s_ref[...] + bi_ref[...]
        if r_ref is not None:
            y = y + r_ref[...].astype(jnp.float32)
        if relu:
            y = jnp.maximum(y, 0.0)
        o_ref[...] = y.astype(o_ref.dtype)


def matmul_fused(a, b, scale, bias, residual=None, relu=False,
                 out_dtype=jnp.bfloat16, operand_dtype=jnp.bfloat16):
    """a:(M,K) b:(K,N) scale/bias:(N,) residual:(M,N) -> (M,N)."""
    M, K = a.shape
    _, N = b.shape

    # Adaptive tiles: big where it pays, but never pad a tiny M up to 128+.
    tm = min(256, _round_up(M, 16))
    tn = min(256, _round_up(N, 128))
    Kp = _round_up(K, 128)
    single_k = Kp <= _K_SINGLE_TILE_MAX
    tk = Kp if single_k else 512
    Kp = _round_up(K, tk)
    Mp, Np = _round_up(M, tm), _round_up(N, tn)
    # Keep >= 2 parallel programs when it is free to do so (v7x: 2 TCs).
    if (Mp // tm) * (Np // tn) == 1 and tm > 128:
        tm = 128
        Mp = _round_up(M, tm)

    def pad2(x, rows, cols, dtype):
        x = x.astype(dtype)
        r, c = x.shape
        if r == rows and c == cols:          # skip redundant pad HBM copies
            return x
        return jnp.pad(x, ((0, rows - r), (0, cols - c)))

    a_p = pad2(a, Mp, Kp, operand_dtype)
    b_p = pad2(b, Kp, Np, operand_dtype)
    s_p = pad2(scale.reshape(1, N), 1, Np, jnp.float32)
    bi_p = pad2(bias.reshape(1, N), 1, Np, jnp.float32)

    has_res = residual is not None
    inputs = [a_p, b_p, s_p, bi_p]
    if has_res:
        inputs.append(pad2(residual, Mp, Np, jnp.bfloat16))

    if single_k:
        in_specs = [
            pl.BlockSpec((tm, tk), lambda i, j: (i, 0)),
            pl.BlockSpec((tk, tn), lambda i, j: (0, j)),
            pl.BlockSpec((1, tn), lambda i, j: (0, j)),
            pl.BlockSpec((1, tn), lambda i, j: (0, j)),
        ]
        if has_res:
            in_specs.append(pl.BlockSpec((tm, tn), lambda i, j: (i, j)))
        out = pl.pallas_call(
            functools.partial(_mm_fused_1k_kernel, relu=relu,
                              has_res=has_res),
            out_shape=jax.ShapeDtypeStruct((Mp, Np), out_dtype),
            grid_spec=pltpu.PrefetchScalarGridSpec(
                num_scalar_prefetch=0,
                grid=(Mp // tm, Np // tn),
                in_specs=in_specs,
                out_specs=pl.BlockSpec((tm, tn), lambda i, j: (i, j))),
            compiler_params=pltpu.CompilerParams(
                dimension_semantics=("parallel", "parallel")),
        )(*inputs)
    else:
        in_specs = [
            pl.BlockSpec((tm, tk), lambda i, j, k: (i, k)),
            pl.BlockSpec((tk, tn), lambda i, j, k: (k, j)),
            pl.BlockSpec((1, tn), lambda i, j, k: (0, j)),
            pl.BlockSpec((1, tn), lambda i, j, k: (0, j)),
        ]
        if has_res:
            in_specs.append(pl.BlockSpec((tm, tn), lambda i, j, k: (i, j)))
        out = pl.pallas_call(
            functools.partial(_mm_fused_kernel, relu=relu, has_res=has_res),
            out_shape=jax.ShapeDtypeStruct((Mp, Np), out_dtype),
            grid_spec=pltpu.PrefetchScalarGridSpec(
                num_scalar_prefetch=0,
                grid=(Mp // tm, Np // tn, Kp // tk),
                in_specs=in_specs,
                out_specs=pl.BlockSpec((tm, tn), lambda i, j, k: (i, j)),
                scratch_shapes=[pltpu.VMEM((tm, tn), jnp.float32)]),
            compiler_params=pltpu.CompilerParams(
                dimension_semantics=("parallel", "parallel", "arbitrary")),
        )(*inputs)

    if Mp != M or Np != N:
        out = out[:M, :N]
    return out


# ----------------------------------------------------------------------------
# im2col (JAX glue).  Tap-major K ordering: (kh, kw, cin).
# ----------------------------------------------------------------------------
def im2col_patches(x, kh, kw, stride, pad):
    """x NHWC -> (N*Ho*Wo, kh*kw, C), Ho, Wo."""
    N, H, W, C = x.shape
    xp = jnp.pad(x, ((0, 0), (pad, pad), (pad, pad), (0, 0)))
    Ho = (H + 2 * pad - kh) // stride + 1
    Wo = (W + 2 * pad - kw) // stride + 1
    cols = []
    for dh in range(kh):
        for dw in range(kw):
            cols.append(xp[:, dh:dh + stride * (Ho - 1) + 1:stride,
                           dw:dw + stride * (Wo - 1) + 1:stride, :])
    patches = jnp.stack(cols, axis=3)            # (N, Ho, Wo, kh*kw, C)
    return patches.reshape(N * Ho * Wo, kh * kw, C), Ho, Wo


# ----------------------------------------------------------------------------
# Convolution wrappers
# ----------------------------------------------------------------------------
def conv1x1_bn(x, p, stride=1, relu=True, residual=None):
    """1x1 conv + folded BN (+ residual + ReLU).  No im2col needed."""
    N, H, W, C = x.shape
    if stride > 1:
        # TODO(synk): fold the stride-2 subsample into the matmul's A
        # BlockSpec; the shortcut activations here are tiny so the XLA
        # strided slice is negligible at these shapes.
        x = x[:, ::stride, ::stride, :]
    Ho, Wo = x.shape[1], x.shape[2]
    a = x.reshape(N * Ho * Wo, C)
    res2d = (residual.reshape(N * Ho * Wo, -1)
             if residual is not None else None)
    out = matmul_fused(a, p["wm"], p["scale"], p["bias"],
                       residual=res2d, relu=relu)
    return out.reshape(N, Ho, Wo, -1)


def conv_dense_bn(x, p, kh, kw, stride, pad, relu=True):
    """Dense kxk conv via im2col + fused matmul."""
    N = x.shape[0]
    patches, Ho, Wo = im2col_patches(x, kh, kw, stride, pad)
    cols = patches.reshape(N * Ho * Wo, -1)
    out = matmul_fused(cols, p["wm"], p["scale"], p["bias"], relu=relu)
    return out.reshape(N, Ho, Wo, -1)


def grouped_conv3x3_bn(x, p, stride, relu=True):
    """Grouped 3x3 conv + folded BN + ReLU as ONE dense fused matmul with a
    block-diagonal weight (built once at parameter time): identical math,
    no group transposes, no per-group 128-lane output padding."""
    return conv_dense_bn(x, p, 3, 3, stride, 1, relu=relu)


# ----------------------------------------------------------------------------
# Max pool 3x3 / stride 2 / pad 1: one Pallas kernel, no HBM tap stack.
# The padded input is reshaped so h = 2i+a, w = 2j+b; every tap of the 3x3
# stride-2 window then becomes a unit-stride slice of the VMEM-resident block.
# ----------------------------------------------------------------------------
def _maxpool_3x3_s2_kernel(x_ref, o_ref):
    _, ho, wo, c = o_ref.shape
    x = x_ref[0]                                   # (ho+1, 2, wo+1, 2*c) bf16
    r = None
    for pi, a in ((0, 0), (0, 1), (1, 0)):
        row = x[pi:pi + ho, a]                     # (ho, wo+1, 2*c)
        for pj, b in ((0, 0), (0, 1), (1, 0)):
            v = row[:, pj:pj + wo, b * c:(b + 1) * c]   # (ho, wo, c)
            r = v if r is None else jnp.maximum(r, v)
    o_ref[0] = r


def maxpool_3x3_s2(x):
    N, H, W, C = x.shape
    Ho = (H + 2 - 3) // 2 + 1
    Wo = (W + 2 - 3) // 2 + 1
    Hp, Wp = 2 * (Ho + 1), 2 * (Wo + 1)
    xp = jnp.pad(x, ((0, 0), (1, Hp - H - 1), (1, Wp - W - 1), (0, 0)),
                 constant_values=-jnp.inf)
    x6 = xp.reshape(N, Ho + 1, 2, Wo + 1, 2 * C)   # contiguous split/merge
    out = pl.pallas_call(
        _maxpool_3x3_s2_kernel,
        out_shape=jax.ShapeDtypeStruct((N, Ho, Wo, C), x.dtype),
        grid_spec=pltpu.PrefetchScalarGridSpec(
            num_scalar_prefetch=0,
            grid=(N,),
            in_specs=[pl.BlockSpec((1, Ho + 1, 2, Wo + 1, 2 * C),
                                   lambda n: (n, 0, 0, 0, 0))],
            out_specs=pl.BlockSpec((1, Ho, Wo, C), lambda n: (n, 0, 0, 0))),
        compiler_params=pltpu.CompilerParams(
            dimension_semantics=("parallel",)),
    )(x6)
    return out


# ----------------------------------------------------------------------------
# Global average pool: lane-dense tap-sum reduction kernel (f32 accumulate).
# ----------------------------------------------------------------------------
def _tap_sum_kernel(x_ref, o_ref, *, scale):
    x = x_ref[...].astype(jnp.float32)             # (T, rows_tile, 128)
    o_ref[...] = (jnp.sum(x, axis=0) * scale).astype(o_ref.dtype)


def global_avgpool(x):
    N, H, W, C = x.shape
    T = H * W
    t = x.reshape(N, T, C).transpose(1, 0, 2).reshape(T, N * C)
    P = N * C
    lanes = 128
    rows = pl.cdiv(P, lanes)
    rt = min(512, _round_up(rows, 16))
    rows_p = _round_up(rows, rt)
    Pp = rows_p * lanes
    xp = t if Pp == P else jnp.pad(t, ((0, 0), (0, Pp - P)))
    xp = xp.reshape(T, rows_p, lanes)

    out = pl.pallas_call(
        functools.partial(_tap_sum_kernel, scale=1.0 / T),
        out_shape=jax.ShapeDtypeStruct((rows_p, lanes), jnp.float32),
        grid_spec=pltpu.PrefetchScalarGridSpec(
            num_scalar_prefetch=0,
            grid=(rows_p // rt,),
            in_specs=[pl.BlockSpec((T, rt, lanes), lambda i: (0, i, 0))],
            out_specs=pl.BlockSpec((rt, lanes), lambda i: (i, 0))),
        compiler_params=pltpu.CompilerParams(
            dimension_semantics=("parallel",)),
    )(xp)
    return out.reshape(Pp)[:P].reshape(N, C)


# ----------------------------------------------------------------------------
# Deterministic parameter construction.  Weights are built directly in
# matmul-friendly layout (pre-transposed, pre-padded where needed, bf16);
# BN folded; grouped weights are block-diagonal dense.
# ----------------------------------------------------------------------------
def _raw_conv_bn(key, cout, cin_g, kh, kw):
    fan_in = cin_g * kh * kw
    w = jax.random.normal(key, (cout, cin_g, kh, kw), jnp.float32)
    w = w * np.float32(np.sqrt(2.0 / fan_in))
    eps = 1e-5
    scale = jnp.full((cout,), 1.0 / np.sqrt(1.0 + eps), jnp.float32)
    bias = jnp.zeros((cout,), jnp.float32)
    return w, scale, bias


def make_dense_conv(key, cin, cout, k):
    w, s, b = _raw_conv_bn(key, cout, cin, k, k)
    wm = jnp.transpose(w, (2, 3, 1, 0)).reshape(k * k * cin, cout)
    return {"wm": wm.astype(jnp.bfloat16), "scale": s, "bias": b}


def make_conv1x1(key, cin, cout):
    w, s, b = _raw_conv_bn(key, cout, cin, 1, 1)
    wm = jnp.transpose(w.reshape(cout, cin), (1, 0))
    return {"wm": wm.astype(jnp.bfloat16), "scale": s, "bias": b}


def make_grouped_conv3x3(key, cin, cout, groups):
    """Grouped 3x3 weights laid out as one block-diagonal dense (9*cin, cout)
    matmul weight with tap-major K ordering (kh, kw, cin)."""
    cg, cog = cin // groups, cout // groups
    w, s, b = _raw_conv_bn(key, cout, cg, 3, 3)    # (cout, cg, 3, 3)
    w_r = (w.reshape(groups, cog, cg, 3, 3)
            .transpose(3, 4, 0, 2, 1)              # (kh, kw, G, cg, cog)
            .reshape(9, groups, cg, cog))
    eye_g = jnp.eye(groups, dtype=w.dtype)
    wd = jnp.einsum("tgic,gh->tgihc", w_r, eye_g)  # (9, G, cg, G, cog)
    wm = wd.reshape(9 * cin, cout)                 # row = t*C + g*cg + i
    return {"wm": wm.astype(jnp.bfloat16), "scale": s, "bias": b}


def build_params(key, num_classes=1000, layers=(1, 1, 1, 1), cardinality=4,
                 planes=(16, 32, 64, 128), stem=16, expansion=4):
    keys = jax.random.split(key, 64)
    it = iter(keys)
    params = {"stem": make_dense_conv(next(it), 3, stem, 7)}
    in_ch = stem
    stages = []
    for si in range(4):
        blocks = []
        p = planes[si]
        width = p                       # scaled-down bottleneck width
        out_ch = p * expansion
        for bi in range(layers[si]):
            stride = 2 if (si > 0 and bi == 0) else 1
            blk = {
                "stride": stride,
                "conv1": make_conv1x1(next(it), in_ch, width),
                "conv2": make_grouped_conv3x3(next(it), width, width,
                                              cardinality),
                "conv3": make_conv1x1(next(it), width, out_ch),
            }
            if stride != 1 or in_ch != out_ch:
                blk["down"] = make_conv1x1(next(it), in_ch, out_ch)
            blocks.append(blk)
            in_ch = out_ch
        stages.append(blocks)
    params["stages"] = stages
    # FC head kept in f32 so the f32 avgpool precision is preserved.
    params["fc_w"] = (jax.random.normal(next(it), (in_ch, num_classes),
                                        jnp.float32) * np.float32(0.01))
    params["fc_b"] = jnp.zeros((num_classes,), jnp.float32)
    params["fc_scale"] = jnp.ones((num_classes,), jnp.float32)
    return params


# ----------------------------------------------------------------------------
# ResNeXt forward
# ----------------------------------------------------------------------------
def bottleneck(x, blk):
    stride = blk["stride"]
    if "down" in blk:
        sc = conv1x1_bn(x, blk["down"], stride=stride, relu=False)
    else:
        sc = x
    y = conv1x1_bn(x, blk["conv1"], stride=1, relu=True)
    y = grouped_conv3x3_bn(y, blk["conv2"], stride=stride, relu=True)
    # fused: relu(bn(conv3(y)) + shortcut)
    y = conv1x1_bn(y, blk["conv3"], stride=1, relu=True, residual=sc)
    return y


def resnext_forward(x_nchw, params):
    # NCHW (PyTorch) -> NHWC, bf16 activations for the Pallas/MXU path.
    x = jnp.transpose(x_nchw, (0, 2, 3, 1)).astype(jnp.bfloat16)
    x = conv_dense_bn(x, params["stem"], 7, 7, stride=2, pad=3, relu=True)
    x = maxpool_3x3_s2(x)
    for stage in params["stages"]:
        for blk in stage:
            x = bottleneck(x, blk)
    pooled = global_avgpool(x)                                    # (N, C) f32
    logits = matmul_fused(pooled, params["fc_w"], params["fc_scale"],
                          params["fc_b"], relu=False,
                          out_dtype=jnp.float32,
                          operand_dtype=jnp.float32)
    return logits                                                 # (N, classes)


# ----------------------------------------------------------------------------
if __name__ == "__main__":
    key = jax.random.PRNGKey(0)
    k_x, k_p = jax.random.split(key)
    # Small ImageNet-like input: (batch=2, channels=3, H=64, W=64), NCHW.
    x = jax.random.normal(k_x, (2, 3, 64, 64), jnp.float32)
    params = build_params(k_p, num_classes=1000)

    logits = resnext_forward(x, params)
    logits = jax.block_until_ready(logits)
    assert logits.shape == (2, 1000)
    assert bool(jnp.all(jnp.isfinite(logits)))
    print("KERNEL_OK")
</pallas_src>

<mosaic_0001>
module attributes {stable_mosaic.version = 11 : i64} {
  func.func @_mm_fused_1k_kernel(%arg0: i32, %arg1: i32, %arg2: memref<256x256xbf16, #tpu.memory_space<vmem>>, %arg3: memref<256x128xbf16, #tpu.memory_space<vmem>>, %arg4: memref<1x128xf32, #tpu.memory_space<vmem>>, %arg5: memref<1x128xf32, #tpu.memory_space<vmem>>, %arg6: memref<256x128xbf16, #tpu.memory_space<vmem>>) attributes {dimension_semantics = [#tpu.dimension_semantics<parallel>, #tpu.dimension_semantics<parallel>], iteration_bounds = array<i64: 8, 1>, scalar_prefetch = 0 : i64, scratch_operands = 0 : i64, tpu.core_type = #tpu.core_type<tc>, window_params = [{transform_indices = @transform_0, window_bounds = array<i64: 256, 256>}, {transform_indices = @transform_1, window_bounds = array<i64: 256, 128>}, {transform_indices = @transform_2, window_bounds = array<i64: 1, 128>}, {transform_indices = @transform_3, window_bounds = array<i64: 1, 128>}, {transform_indices = @transform_4, window_bounds = array<i64: 256, 128>}]} {
    %c0 = arith.constant 0 : index
    %c0_0 = arith.constant 0 : index
    %0 = vector.load %arg2[%c0, %c0_0] : memref<256x256xbf16, #tpu.memory_space<vmem>>, vector<256x256xbf16>
    %c0_1 = arith.constant 0 : index
    %c0_2 = arith.constant 0 : index
    %1 = vector.load %arg3[%c0_1, %c0_2] : memref<256x128xbf16, #tpu.memory_space<vmem>>, vector<256x128xbf16>
    %cst = arith.constant dense<0.000000e+00> : vector<256x128xf32>
    %2 = tpu.matmul %0, %1, %cst {dimension_numbers = #tpu.dot_dimension_numbers<[1], [0], [0], [1], [0, 0, 1, 1], [], []>} : vector<256x256xbf16>, vector<256x128xbf16>, vector<256x128xf32> -> vector<256x128xf32>
    %c0_3 = arith.constant 0 : index
    %c0_4 = arith.constant 0 : index
    %3 = vector.load %arg4[%c0_3, %c0_4] : memref<1x128xf32, #tpu.memory_space<vmem>>, vector<1x128xf32>
    %4 = vector.broadcast %3 : vector<1x128xf32> to vector<256x128xf32>
    %5 = arith.mulf %2, %4 : vector<256x128xf32>
    %c0_5 = arith.constant 0 : index
    %c0_6 = arith.constant 0 : index
    %6 = vector.load %arg5[%c0_5, %c0_6] : memref<1x128xf32, #tpu.memory_space<vmem>>, vector<1x128xf32>
    %7 = vector.broadcast %6 : vector<1x128xf32> to vector<256x128xf32>
    %8 = arith.addf %5, %7 : vector<256x128xf32>
    %cst_7 = arith.constant 0.000000e+00 : f32
    %9 = vector.broadcast %cst_7 : f32 to vector<256x128xf32>
    %10 = arith.maximumf %8, %9 : vector<256x128xf32>
    %11 = arith.truncf %10 : vector<256x128xf32> to vector<256x128xbf16>
    %c0_8 = arith.constant 0 : index
    %c0_9 = arith.constant 0 : index
    %12 = vector.load %arg6[%c0_8, %c0_9] : memref<256x128xbf16, #tpu.memory_space<vmem>>, vector<256x128xbf16>
    tpu.vector_store %arg6[%c0_8, %c0_9], %11 {strides = array<i32>} : memref<256x128xbf16, #tpu.memory_space<vmem>>, vector<256x128xbf16>,
    return
  }
  func.func @transform_0(%arg0: i32, %arg1: i32) -> (i32, i32) {
    %c0_i32 = arith.constant 0 : i32
    %c0_i32_0 = arith.constant 0 : i32
    return %arg0, %c0_i32 : i32, i32
  }
  func.func @transform_1(%arg0: i32, %arg1: i32) -> (i32, i32) {
    %c0_i32 = arith.constant 0 : i32
    %c0_i32_0 = arith.constant 0 : i32
    return %c0_i32, %arg1 : i32, i32
  }
  func.func @transform_2(%arg0: i32, %arg1: i32) -> (i32, i32) {
    %c0_i32 = arith.constant 0 : i32
    %c0_i32_0 = arith.constant 0 : i32
    return %c0_i32, %arg1 : i32, i32
  }
  func.func @transform_3(%arg0: i32, %arg1: i32) -> (i32, i32) {
    %c0_i32 = arith.constant 0 : i32
    %c0_i32_0 = arith.constant 0 : i32
    return %c0_i32, %arg1 : i32, i32
  }
  func.func @transform_4(%arg0: i32, %arg1: i32) -> (i32, i32) {
    %c0_i32 = arith.constant 0 : i32
    return %arg0, %arg1 : i32, i32
  }
}

</mosaic_0001>

<llo_original>
// kernel: tpu_custom_call.1
$region0: #{tpu_custom_call.1}
  #allocation0 [shape = 'u32[]', space=smem, size = 0x4, offset = 0x4, fixed_abs, tag = 'smem constant byte address 0x4 - core index']
  #allocation1 [shape = 'u32[144,128]{1,0:T(1,128)}', space=vmem, size = 0x12000, scoped, tag = 'internal scratch']
  %s0 = inlined_call_operand.hbm [shape: bf16[2048,256], index: 0, kind: input, shape index: {}]
  %s1 = inlined_call_operand.hbm [shape: bf16[256,128], index: 1, kind: input, shape index: {}]
  %s2 = inlined_call_operand.vmem [shape: f32[1,128], index: 2, kind: input, shape index: {}]
  %s3 = inlined_call_operand.vmem [shape: f32[1,128], index: 3, kind: input, shape index: {}]
  %s4 = inlined_call_operand.hbm [shape: bf16[2048,128], index: 4, kind: output, shape index: {}]
  %s5 = sld [smem:[#allocation0]]
  $region57: #{tpu_custom_call.1} parent=0
    _
  %s7 = ssub.s32 1, %s5
  %s8 = scalar_select 0, %s7, %s5
  $region1: #{tpu_custom_call.1} parent=0
    #allocation2 [shape = 'u8[262144]{0}', space=vmem, size = 0x40000, scoped, tag = 'input window, operand 0']
    #allocation3 [shape = 's32[2]{0}', space=sflag, size = 0x8, scoped, tag = 'scoped memory for tpu_custom_call.1']
    #allocation4 [shape = 's32[2]{0}', space=sflag, size = 0x8, scoped, tag = 'scoped memory for tpu_custom_call.1']
    #allocation5 [shape = 'u8[65536]{0}', space=vmem, size = 0x10000, scoped, tag = 'input window, operand 1, single buffered']
    #allocation6 [shape = 's32[1]{0}', space=sflag, size = 0x4, scoped, tag = 'scoped memory for tpu_custom_call.1']
    #allocation7 [shape = 'u8[131072]{0}', space=vmem, size = 0x20000, scoped, tag = 'output window, operand 0']
    %9 = vsyncpa [#allocation3], 0
    %s10 = scalar_lea.sflag [#allocation3], 1
    %11 = vsyncpa %s10, 0
    %12 = vsyncpa [#allocation6], 0
    %13 = vsyncpa [#allocation4], 0
    %s14 = scalar_lea.sflag [#allocation4], 1
    %15 = vsyncpa %s14, 0
    loop: start=0, step=1, limit=10
    $region2: #{tpu_custom_call.1} parent=1 // loop_pre_header
      _
    $region3: #{tpu_custom_call.1} parent=1 // loop_header
      %s17 = sphi 0, %s21
      %p18 = scmp.ge.s32.totalorder %s17, 10
      %s24 = sphi 0, %s36
      %s25 = sphi 0, %s32
      %s26 = sphi 0, %s24
      %s27 = sphi 0, %s25
      %s28 = sphi 0, %s26
      %s29 = sphi 0, %s27
      %s39 = sphi 0, %s41
      %s42 = sphi 0, %s39
      %s43 = sphi 0, %s42
      %s59 = sphi 0, %s43
      %s65 = sphi 0, %s67
      %s68 = sphi 0, %s65
      %s69 = sphi 0, %s68
      %s85 = sphi 0, %s69
      %s91 = sphi 0, %s93
      %s94 = sphi 0, %s91
      %s95 = sphi 0, %s94
      %s111 = sphi 0, %s95
      %s117 = sphi 0, %s119
      %s120 = sphi 0, %s117
      %s121 = sphi 0, %s120
      %s137 = sphi 0, %s121
      %s145 = sphi 0, %s147
      %s148 = sphi 0, %s145
      %s149 = sphi 0, %s148
      %s165 = sphi 0, %s149
    $region4: #{tpu_custom_call.1} parent=1 // loop_header_branch
      %20 = sbr.rel (%p18) target = $region8
    $region5: #{tpu_custom_call.1} parent=1 // loop_body
      %s22 = ssub.s32 %s17, 1
      %s23 = ssub.s32 %s17, 2
      %s30 = sadd.s32 1, %s25
      %p31 = scmp.ge.s32.totalorder %s30, 1
      %s32 = scalar_select %p31, 0, %s30
      %s33 = sadd.s32 1, %s24
      %s34 = scalar_select %p31, %s33, %s24
      %p35 = scmp.ge.s32.totalorder %s34, 8
      %s36 = scalar_select %p35, 0, %s34
      %s37 = ssub.s32 %s24, %s36
      %p38 = scmp.eq.s32.totalorder %s37, 0
      %s40 = sadd.s32 %s39, 1
      %s41 = scalar_select %p38, %s39, %s40
      %p44 = pneg %p38
      %p45 = scmp.eq.s32.totalorder %s17, 7
      %p46 = por %p44, %p45
      %p47 = scmp.ne.s32.totalorder %s39, %s42
      %p48 = scmp.eq.s32.totalorder %s17, 0
      %p49 = por %p47, %p48
      %p50 = scmp.ne.s32.totalorder %s39, %s42
      %p51 = scmp.eq.s32.totalorder %s22, 7
      %p52 = por %p50, %p51
      %p53 = scmp.ne.s32.totalorder %s42, %s43
      %p54 = scmp.eq.s32.totalorder %s22, 0
      %p55 = por %p53, %p54
      %p56 = scmp.ne.s32.totalorder %s42, %s43
      %p57 = scmp.eq.s32.totalorder %s23, 7
      %p58 = por %p56, %p57
      %p60 = scmp.ne.s32.totalorder %s43, %s59
      %p61 = scmp.eq.s32.totalorder %s23, 0
      %p62 = por %p60, %p61
      %s63 = ssub.s32 %s25, %s32
      %p64 = scmp.eq.s32.totalorder %s63, 0
      %s66 = sadd.s32 %s65, 1
      %s67 = scalar_select %p64, %s65, %s66
      %p70 = pneg %p64
      %p71 = scmp.eq.s32.totalorder %s17, 7
      %p72 = por %p70, %p71
      %p73 = scmp.ne.s32.totalorder %s65, %s68
      %p74 = scmp.eq.s32.totalorder %s17, 0
      %p75 = por %p73, %p74
      %p76 = scmp.ne.s32.totalorder %s65, %s68
      %p77 = scmp.eq.s32.totalorder %s22, 7
      %p78 = por %p76, %p77
      %p79 = scmp.ne.s32.totalorder %s68, %s69
      %p80 = scmp.eq.s32.totalorder %s22, 0
      %p81 = por %p79, %p80
      %p82 = scmp.ne.s32.totalorder %s68, %s69
      %p83 = scmp.eq.s32.totalorder %s23, 7
      %p84 = por %p82, %p83
      %p86 = scmp.ne.s32.totalorder %s69, %s85
      %p87 = scmp.eq.s32.totalorder %s23, 0
      %p88 = por %p86, %p87
      %s89 = ssub.s32 %s25, %s32
      %p90 = scmp.eq.s32.totalorder %s89, 0
      %s92 = sadd.s32 %s91, 1
      %s93 = scalar_select %p90, %s91, %s92
      %p96 = pneg %p90
      %p97 = scmp.eq.s32.totalorder %s17, 7
      %p98 = por %p96, %p97
      %p99 = scmp.ne.s32.totalorder %s91, %s94
      %p100 = scmp.eq.s32.totalorder %s17, 0
      %p101 = por %p99, %p100
      %p102 = scmp.ne.s32.totalorder %s91, %s94
      %p103 = scmp.eq.s32.totalorder %s22, 7
      %p104 = por %p102, %p103
      %p105 = scmp.ne.s32.totalorder %s94, %s95
      %p106 = scmp.eq.s32.totalorder %s22, 0
      %p107 = por %p105, %p106
      %p108 = scmp.ne.s32.totalorder %s94, %s95
      %p109 = scmp.eq.s32.totalorder %s23, 7
      %p110 = por %p108, %p109
      %p112 = scmp.ne.s32.totalorder %s95, %s111
      %p113 = scmp.eq.s32.totalorder %s23, 0
      %p114 = por %p112, %p113
      %s115 = ssub.s32 %s25, %s32
      %p116 = scmp.eq.s32.totalorder %s115, 0
      %s118 = sadd.s32 %s117, 1
      %s119 = scalar_select %p116, %s117, %s118
      %p122 = pneg %p116
      %p123 = scmp.eq.s32.totalorder %s17, 7
      %p124 = por %p122, %p123
      %p125 = scmp.ne.s32.totalorder %s117, %s120
      %p126 = scmp.eq.s32.totalorder %s17, 0
      %p127 = por %p125, %p126
      %p128 = scmp.ne.s32.totalorder %s117, %s120
      %p129 = scmp.eq.s32.totalorder %s22, 7
      %p130 = por %p128, %p129
      %p131 = scmp.ne.s32.totalorder %s120, %s121
      %p132 = scmp.eq.s32.totalorder %s22, 0
      %p133 = por %p131, %p132
      %p134 = scmp.ne.s32.totalorder %s120, %s121
      %p135 = scmp.eq.s32.totalorder %s23, 7
      %p136 = por %p134, %p135
      %p138 = scmp.ne.s32.totalorder %s121, %s137
      %p139 = scmp.eq.s32.totalorder %s23, 0
      %p140 = por %p138, %p139
      %s141 = ssub.s32 %s24, %s36
      %s142 = ssub.s32 %s25, %s32
      %s143 = sor.u32 %s141, %s142
      %p144 = scmp.eq.s32.totalorder %s143, 0
      %s146 = sadd.s32 %s145, 1
      %s147 = scalar_select %p144, %s145, %s146
      %p150 = pneg %p144
      %p151 = scmp.eq.s32.totalorder %s17, 7
      %p152 = por %p150, %p151
      %p153 = scmp.ne.s32.totalorder %s145, %s148
      %p154 = scmp.eq.s32.totalorder %s17, 0
      %p155 = por %p153, %p154
      %p156 = scmp.ne.s32.totalorder %s145, %s148
      %p157 = scmp.eq.s32.totalorder %s22, 7
      %p158 = por %p156, %p157
      %p159 = scmp.ne.s32.totalorder %s148, %s149
      %p160 = scmp.eq.s32.totalorder %s22, 0
      %p161 = por %p159, %p160
      %p162 = scmp.ne.s32.totalorder %s148, %s149
      %p163 = scmp.eq.s32.totalorder %s23, 7
      %p164 = por %p162, %p163
      %p166 = scmp.ne.s32.totalorder %s149, %s165
      %p167 = scmp.eq.s32.totalorder %s23, 0
      %p168 = por %p166, %p167
      %p169 = scmp.le.s32.totalorder 1, %s17
      %p170 = scmp.lt.s32.totalorder %s17, 9
      %p171 = pnand %p169, %p170
      %p172 = pneg %p171
      // Predicated region
      $region9: #{tpu_custom_call.1} parent=5 // pred_check
        _
      $region10: #{tpu_custom_call.1} parent=5 // pred_check_branch
        %174 = sbr.rel (%p171) target = $region12
      $region11: #{tpu_custom_call.1} parent=5 // pred_region
        %s175 = ssub.s32 %s17, 1
        // Predicated region
        $region13: #{tpu_custom_call.1} parent=11 // pred_check
          %p176 = pneg %p81
        $region14: #{tpu_custom_call.1} parent=11 // pred_check_branch
          %178 = sbr.rel (%p176) target = $region16
        $region15: #{tpu_custom_call.1} parent=11 // pred_region
          %s180 = ssub.s32 2048, 2048
          %181 = vsyncadd [#allocation6], %s180
          %s182 = smul.addr %s27, 64
          %s183 = scalar_lea.hbm %s1, %s182
          %s184 = sshll.u32 [#allocation5], 4
          %s185 = int_to_ptr.vmem [resolvable:$true] %s184
          %190 = dma.hbm_to_vmem [thread:$0]  %s183, 2048, %s185, [#allocation6], 64, 64, 4
        $region16: #{tpu_custom_call.1} parent=11 // pred_fallthru
          _
        // Predicated region
        $region17: #{tpu_custom_call.1} parent=11 // pred_check
          %p191 = pneg %p107
        $region18: #{tpu_custom_call.1} parent=11 // pred_check_branch
          %193 = sbr.rel (%p191) target = $region20
        $region19: #{tpu_custom_call.1} parent=11 // pred_region
          %p194 = scmp.lt.s32.totalorder %s27, 0
          %s195 = scalar_select %p194, %s27, 0
          %s196 = scalar_lea.vmem %s2, %s195
        $region20: #{tpu_custom_call.1} parent=11 // pred_fallthru
          _
        // Predicated region
        $region21: #{tpu_custom_call.1} parent=11 // pred_check
          %p197 = pneg %p133
        $region22: #{tpu_custom_call.1} parent=11 // pred_check_branch
          %199 = sbr.rel (%p197) target = $region24
        $region23: #{tpu_custom_call.1} parent=11 // pred_region
          %p200 = scmp.lt.s32.totalorder %s27, 0
          %s201 = scalar_select %p200, %s27, 0
          %s202 = scalar_lea.vmem %s3, %s201
        $region24: #{tpu_custom_call.1} parent=11 // pred_fallthru
          _
      $region12: #{tpu_custom_call.1} parent=5 // pred_fallthru
        _
      %p203 = scmp.lt.s32.totalorder %s17, 8
      // Predicated region
      $region25: #{tpu_custom_call.1} parent=5 // pred_check
        %p204 = pneg %p203
      $region26: #{tpu_custom_call.1} parent=5 // pred_check_branch
        %206 = sbr.rel (%p204) target = $region28
      $region27: #{tpu_custom_call.1} parent=5 // pred_region
        // Predicated region
        $region29: #{tpu_custom_call.1} parent=27 // pred_check
          %p207 = pneg %p49
        $region30: #{tpu_custom_call.1} parent=27 // pred_check_branch
          %209 = sbr.rel (%p207) target = $region32
        $region31: #{tpu_custom_call.1} parent=27 // pred_region
          %s210 = sand.u32 %s39, 1
          %s211 = scalar_lea.sflag [#allocation3], %s210
          %s212 = sand.u32 %s39, 1
          %s213 = smul.addr %s212, 256
          %s214 = scalar_lea.vmem [#allocation2], %s213
          %s215 = smul.u32 32, %s24
          %s217 = ssub.s32 4096, 4096
          %218 = vsyncadd %s211, %s217
          %s219 = smul.addr %s215, 2
          %s220 = smul.addr %s219, 64
          %s221 = scalar_lea.hbm %s0, %s220
          %s222 = sshll.u32 %s214, 4
          %s223 = int_to_ptr.vmem [resolvable:$true] %s222
          %228 = dma.hbm_to_vmem [thread:$0]  %s221, 4096, %s223, %s211, 128, 128, 8
        $region32: #{tpu_custom_call.1} parent=27 // pred_fallthru
          _
      $region28: #{tpu_custom_call.1} parent=5 // pred_fallthru
        _
      %p229 = scmp.le.s32.totalorder 1, %s17
      %p230 = scmp.lt.s32.totalorder %s17, 9
      %p231 = pnand %p229, %p230
      %p232 = pneg %p231
      // Predicated region
      $region33: #{tpu_custom_call.1} parent=5 // pred_check
        _
      $region34: #{tpu_custom_call.1} parent=5 // pred_check_branch
        %234 = sbr.rel (%p231) target = $region36
      $region35: #{tpu_custom_call.1} parent=5 // pred_region
        %s235 = ssub.s32 %s17, 1
        %s236 = sand.u32 %s42, 1
        %s237 = scalar_lea.sflag [#allocation3], %s236
        %s238 = sand.u32 %s42, 1
        %s239 = smul.addr %s238, 256
        %s240 = scalar_lea.vmem [#allocation2], %s239
        // Predicated region
        $region37: #{tpu_custom_call.1} parent=35 // pred_check
          %p241 = pneg %p55
        $region38: #{tpu_custom_call.1} parent=35 // pred_check_branch
          %243 = sbr.rel (%p241) target = $region40
        $region39: #{tpu_custom_call.1} parent=35 // pred_region
          %244 = dma.done %s237, 4096
        $region40: #{tpu_custom_call.1} parent=35 // pred_fallthru
          _
        // Predicated region
        $region41: #{tpu_custom_call.1} parent=35 // pred_check
          %p245 = pneg %p81
        $region42: #{tpu_custom_call.1} parent=35 // pred_check_branch
          %247 = sbr.rel (%p245) target = $region44
        $region43: #{tpu_custom_call.1} parent=35 // pred_region
          %248 = dma.done [#allocation6], 2048
        $region44: #{tpu_custom_call.1} parent=35 // pred_fallthru
          _
        %s249 = sand.u32 %s42, 1
        %s250 = scalar_lea.sflag [#allocation3], %s249
        %s251 = sand.u32 %s42, 1
        %s252 = smul.addr %s251, 256
        %s253 = scalar_lea.vmem [#allocation2], %s252
        %p254 = pneg %p55
        %p255 = pneg %p52
        %p256 = pneg %p81
        %p257 = pneg %p78
        %p258 = scmp.lt.s32.totalorder %s27, 0
        %s259 = scalar_select %p258, %s27, 0
        %s260 = scalar_lea.vmem %s2, %s259
        %p261 = pneg %p107
        %p262 = pneg %p104
        %p263 = scmp.lt.s32.totalorder %s27, 0
        %s264 = scalar_select %p263, %s27, 0
        %s265 = scalar_lea.vmem %s3, %s264
        %p266 = pneg %p133
        %p267 = pneg %p130
        %p268 = pneg %p161
        %p269 = pneg %p158
        %s270 = sand.u32 %s148, 1
        %s271 = scalar_lea.sflag [#allocation4], %s270
        %s272 = sand.u32 %s148, 1
        %s273 = smul.addr %s272, 128
        %s274 = scalar_lea.vmem [#allocation7], %s273
        %s275 = smul.u32 32, %s26
        %p276 = scmp.lt.s32.totalorder %s27, 0
        %s277 = scalar_select %p276, %s27, 0
        %s278 = scalar_lea.vmem %s2, %s277
        %p279 = scmp.lt.s32.totalorder %s27, 0
        %s280 = scalar_select %p279, %s27, 0
        %s281 = scalar_lea.vmem %s3, %s280
        %s282 = smul.u32 32, %s26
        %v284 = vld [vmem:[%s240] sm:$0xff]
        %v285 = vld [vmem:[%s240 + $0x8] sm:$0xff]
        %v286 = vld [vmem:[%s240 + $0x10] sm:$0xff]
        %v287 = vld [vmem:[%s240 + $0x18] sm:$0xff]
        %v288 = vld [vmem:[%s240 + $0x20] sm:$0xff]
        %v289 = vld [vmem:[%s240 + $0x28] sm:$0xff]
        %v290 = vld [vmem:[%s240 + $0x30] sm:$0xff]
        %v291 = vld [vmem:[%s240 + $0x38] sm:$0xff]
        %v292 = vld [vmem:[%s240 + $0x40] sm:$0xff]
        %v293 = vld [vmem:[%s240 + $0x48] sm:$0xff]
        %v294 = vld [vmem:[%s240 + $0x50] sm:$0xff]
        %v295 = vld [vmem:[%s240 + $0x58] sm:$0xff]
        %v296 = vld [vmem:[%s240 + $0x60] sm:$0xff]
        %v297 = vld [vmem:[%s240 + $0x68] sm:$0xff]
        %v298 = vld [vmem:[%s240 + $0x70] sm:$0xff]
        %v299 = vld [vmem:[%s240 + $0x78] sm:$0xff]
        %v300 = vld [vmem:[%s240 + $0x80] sm:$0xff]
        %v301 = vld [vmem:[%s240 + $0x88] sm:$0xff]
        %v302 = vld [vmem:[%s240 + $0x90] sm:$0xff]
        %v303 = vld [vmem:[%s240 + $0x98] sm:$0xff]
        %v304 = vld [vmem:[%s240 + $0xa0] sm:$0xff]
        %v305 = vld [vmem:[%s240 + $0xa8] sm:$0xff]
        %v306 = vld [vmem:[%s240 + $0xb0] sm:$0xff]
        %v307 = vld [vmem:[%s240 + $0xb8] sm:$0xff]
        %v308 = vld [vmem:[%s240 + $0xc0] sm:$0xff]
        %v309 = vld [vmem:[%s240 + $0xc8] sm:$0xff]
        %v310 = vld [vmem:[%s240 + $0xd0] sm:$0xff]
        %v311 = vld [vmem:[%s240 + $0xd8] sm:$0xff]
        %v312 = vld [vmem:[%s240 + $0xe0] sm:$0xff]
        %v313 = vld [vmem:[%s240 + $0xe8] sm:$0xff]
        %v314 = vld [vmem:[%s240 + $0xf0] sm:$0xff]
        %v315 = vld [vmem:[%s240 + $0xf8] sm:$0xff]
        %v316 = vld [vmem:[#allocation5] sm:$0xf]
        %v317 = vld [vmem:[#allocation5 + $0x4] sm:$0xf]
        %v318 = vld [vmem:[#allocation5 + $0x8] sm:$0xf]
        %v319 = vld [vmem:[#allocation5 + $0xc] sm:$0xf]
        %v320 = vld [vmem:[#allocation5 + $0x10] sm:$0xf]
        %v321 = vld [vmem:[#allocation5 + $0x14] sm:$0xf]
        %v322 = vld [vmem:[#allocation5 + $0x18] sm:$0xf]
        %v323 = vld [vmem:[#allocation5 + $0x1c] sm:$0xf]
        %v324 = vld [vmem:[#allocation5 + $0x20] sm:$0xf]
        %v325 = vld [vmem:[#allocation5 + $0x24] sm:$0xf]
        %v326 = vld [vmem:[#allocation5 + $0x28] sm:$0xf]
        %v327 = vld [vmem:[#allocation5 + $0x2c] sm:$0xf]
        %v328 = vld [vmem:[#allocation5 + $0x30] sm:$0xf]
        %v329 = vld [vmem:[#allocation5 + $0x34] sm:$0xf]
        %v330 = vld [vmem:[#allocation5 + $0x38] sm:$0xf]
        %v331 = vld [vmem:[#allocation5 + $0x3c] sm:$0xf]
        %v332 = vld [vmem:[#allocation5 + $0x40] sm:$0xf]
        %v333 = vld [vmem:[#allocation5 + $0x44] sm:$0xf]
        %v334 = vld [vmem:[#allocation5 + $0x48] sm:$0xf]
        %v335 = vld [vmem:[#allocation5 + $0x4c] sm:$0xf]
        %v336 = vld [vmem:[#allocation5 + $0x50] sm:$0xf]
        %v337 = vld [vmem:[#allocation5 + $0x54] sm:$0xf]
        %v338 = vld [vmem:[#allocation5 + $0x58] sm:$0xf]
        %v339 = vld [vmem:[#allocation5 + $0x5c] sm:$0xf]
        %v340 = vld [vmem:[#allocation5 + $0x60] sm:$0xf]
        %v341 = vld [vmem:[#allocation5 + $0x64] sm:$0xf]
        %v342 = vld [vmem:[#allocation5 + $0x68] sm:$0xf]
        %v343 = vld [vmem:[#allocation5 + $0x6c] sm:$0xf]
        %v344 = vld [vmem:[#allocation5 + $0x70] sm:$0xf]
        %v345 = vld [vmem:[#allocation5 + $0x74] sm:$0xf]
        %v346 = vld [vmem:[#allocation5 + $0x78] sm:$0xf]
        %v347 = vld [vmem:[#allocation5 + $0x7c] sm:$0xf]
        %v380 = vunpack.c.l.b16 %v284
        %v381 = vunpack.c.h.b16 %v284
        %v382 = vunpack.c.l.b16 %v285
        %v383 = vunpack.c.h.b16 %v285
        %v384 = vunpack.c.l.b16 %v286
        %v385 = vunpack.c.h.b16 %v286
        %v386 = vunpack.c.l.b16 %v287
        %v387 = vunpack.c.h.b16 %v287
        %v388 = vunpack.c.l.b16 %v288
        %v389 = vunpack.c.h.b16 %v288
        %v390 = vunpack.c.l.b16 %v289
        %v391 = vunpack.c.h.b16 %v289
        %v392 = vunpack.c.l.b16 %v290
        %v393 = vunpack.c.h.b16 %v290
        %v394 = vunpack.c.l.b16 %v291
        %v395 = vunpack.c.h.b16 %v291
        %v396 = vunpack.c.l.b16 %v292
        %v397 = vunpack.c.h.b16 %v292
        %v398 = vunpack.c.l.b16 %v293
        %v399 = vunpack.c.h.b16 %v293
        %v400 = vunpack.c.l.b16 %v294
        %v401 = vunpack.c.h.b16 %v294
        %v402 = vunpack.c.l.b16 %v295
        %v403 = vunpack.c.h.b16 %v295
        %v404 = vunpack.c.l.b16 %v296
        %v405 = vunpack.c.h.b16 %v296
        %v406 = vunpack.c.l.b16 %v297
        %v407 = vunpack.c.h.b16 %v297
        %v408 = vunpack.c.l.b16 %v298
        %v409 = vunpack.c.h.b16 %v298
        %v410 = vunpack.c.l.b16 %v299
        %v411 = vunpack.c.h.b16 %v299
        %v412 = vunpack.c.l.b16 %v300
        %v413 = vunpack.c.h.b16 %v300
        %v414 = vunpack.c.l.b16 %v301
        %v415 = vunpack.c.h.b16 %v301
        %v416 = vunpack.c.l.b16 %v302
        %v417 = vunpack.c.h.b16 %v302
        %v418 = vunpack.c.l.b16 %v303
        %v419 = vunpack.c.h.b16 %v303
        %v420 = vunpack.c.l.b16 %v304
        %v421 = vunpack.c.h.b16 %v304
        %v422 = vunpack.c.l.b16 %v305
        %v423 = vunpack.c.h.b16 %v305
        %v424 = vunpack.c.l.b16 %v306
        %v425 = vunpack.c.h.b16 %v306
        %v426 = vunpack.c.l.b16 %v307
        %v427 = vunpack.c.h.b16 %v307
        %v428 = vunpack.c.l.b16 %v308
        %v429 = vunpack.c.h.b16 %v308
        %v430 = vunpack.c.l.b16 %v309
        %v431 = vunpack.c.h.b16 %v309
        %v432 = vunpack.c.l.b16 %v310
        %v433 = vunpack.c.h.b16 %v310
        %v434 = vunpack.c.l.b16 %v311
        %v435 = vunpack.c.h.b16 %v311
        %v436 = vunpack.c.l.b16 %v312
        %v437 = vunpack.c.h.b16 %v312
        %v438 = vunpack.c.l.b16 %v313
        %v439 = vunpack.c.h.b16 %v313
        %v440 = vunpack.c.l.b16 %v314
        %v441 = vunpack.c.h.b16 %v314
        %v442 = vunpack.c.l.b16 %v315
        %v443 = vunpack.c.h.b16 %v315
        %v444 = vpack.c.b16 %v382, %v380
        %v445 = vpack.c.b16 %v383, %v381
        %v446 = vpack.c.b16 %v386, %v384
        %v447 = vpack.c.b16 %v387, %v385
        %v448 = vpack.c.b16 %v390, %v388
        %v449 = vpack.c.b16 %v391, %v389
        %v450 = vpack.c.b16 %v394, %v392
        %v451 = vpack.c.b16 %v395, %v393
        %v452 = vpack.c.b16 %v398, %v396
        %v453 = vpack.c.b16 %v399, %v397
        %v454 = vpack.c.b16 %v402, %v400
        %v455 = vpack.c.b16 %v403, %v401
        %v456 = vpack.c.b16 %v406, %v404
        %v457 = vpack.c.b16 %v407, %v405
        %v458 = vpack.c.b16 %v410, %v408
        %v459 = vpack.c.b16 %v411, %v409
        %v460 = vpack.c.b16 %v414, %v412
        %v461 = vpack.c.b16 %v415, %v413
        %v462 = vpack.c.b16 %v418, %v416
        %v463 = vpack.c.b16 %v419, %v417
        %v464 = vpack.c.b16 %v422, %v420
        %v465 = vpack.c.b16 %v423, %v421
        %v466 = vpack.c.b16 %v426, %v424
        %v467 = vpack.c.b16 %v427, %v425
        %v468 = vpack.c.b16 %v430, %v428
        %v469 = vpack.c.b16 %v431, %v429
        %v470 = vpack.c.b16 %v434, %v432
        %v471 = vpack.c.b16 %v435, %v433
        %v472 = vpack.c.b16 %v438, %v436
        %v473 = vpack.c.b16 %v439, %v437
        %v474 = vpack.c.b16 %v442, %v440
        %v475 = vpack.c.b16 %v443, %v441
        %v540 = vunpack.c.l.b16 %v316
        %v541 = vunpack.c.l.b16 %v317
        %v542 = vunpack.c.l.b16 %v318
        %v543 = vunpack.c.l.b16 %v319
        %v544 = vunpack.c.l.b16 %v320
        %v545 = vunpack.c.l.b16 %v321
        %v546 = vunpack.c.l.b16 %v322
        %v547 = vunpack.c.l.b16 %v323
        %v548 = vunpack.c.l.b16 %v324
        %v549 = vunpack.c.l.b16 %v325
        %v550 = vunpack.c.l.b16 %v326
        %v551 = vunpack.c.l.b16 %v327
        %v552 = vunpack.c.l.b16 %v328
        %v553 = vunpack.c.l.b16 %v329
        %v554 = vunpack.c.l.b16 %v330
        %v555 = vunpack.c.l.b16 %v331
        %v556 = vunpack.c.l.b16 %v332
        %v557 = vunpack.c.l.b16 %v333
        %v558 = vunpack.c.l.b16 %v334
        %v559 = vunpack.c.l.b16 %v335
        %v560 = vunpack.c.l.b16 %v336
        %v561 = vunpack.c.l.b16 %v337
        %v562 = vunpack.c.l.b16 %v338
        %v563 = vunpack.c.l.b16 %v339
        %v564 = vunpack.c.l.b16 %v340
        %v565 = vunpack.c.l.b16 %v341
        %v566 = vunpack.c.l.b16 %v342
        %v567 = vunpack.c.l.b16 %v343
        %v568 = vunpack.c.l.b16 %v344
        %v569 = vunpack.c.l.b16 %v345
        %v570 = vunpack.c.l.b16 %v346
        %v571 = vunpack.c.l.b16 %v347
        %v572 = vpack.c.b16 %v541, %v540
        %v573 = vpack.c.b16 %v543, %v542
        %v574 = vpack.c.b16 %v545, %v544
        %v575 = vpack.c.b16 %v547, %v546
        %v576 = vpack.c.b16 %v549, %v548
        %v577 = vpack.c.b16 %v551, %v550
        %v578 = vpack.c.b16 %v553, %v552
        %v579 = vpack.c.b16 %v555, %v554
        %v580 = vpack.c.b16 %v557, %v556
        %v581 = vpack.c.b16 %v559, %v558
        %v582 = vpack.c.b16 %v561, %v560
        %v583 = vpack.c.b16 %v563, %v562
        %v584 = vpack.c.b16 %v565, %v564
        %v585 = vpack.c.b16 %v567, %v566
        %v586 = vpack.c.b16 %v569, %v568
        %v587 = vpack.c.b16 %v571, %v570
        %604 = vmatprep.subr.bf16.mxu0 0
        %605 = vmatpush1.bf16.msra.mxu0 %v572
        %606 = vmatprep.subr.bf16.mxu0 0
        %607 = vmatpush1.bf16.msra.mxu0 %v573
        %608 = vmatprep.subr.bf16.mxu0 0
        %609 = vmatpush1.bf16.msra.mxu0 %v574
        %610 = vmatprep.subr.bf16.mxu0 0
        %611 = vmatpush1.bf16.msra.mxu0 %v575
        %612 = vmatprep.subr.bf16.mxu0 0
        %613 = vmatpush1.bf16.msra.mxu0 %v576
        %614 = vmatprep.subr.bf16.mxu0 0
        %615 = vmatpush1.bf16.msra.mxu0 %v577
        %616 = vmatprep.subr.bf16.mxu0 0
        %617 = vmatpush1.bf16.msra.mxu0 %v578
        %618 = vmatprep.subr.bf16.mxu0 0
        %619 = vmatpush1.bf16.msra.mxu0 %v579
        %620 = vmatprep.subr.bf16.mxu0 0
        %621 = vmatpush1.bf16.msra.mxu0 %v580
        %622 = vmatprep.subr.bf16.mxu0 0
        %623 = vmatpush1.bf16.msra.mxu0 %v581
        %624 = vmatprep.subr.bf16.mxu0 0
        %625 = vmatpush1.bf16.msra.mxu0 %v582
        %626 = vmatprep.subr.bf16.mxu0 0
        %627 = vmatpush1.bf16.msra.mxu0 %v583
        %628 = vmatprep.subr.bf16.mxu0 0
        %629 = vmatpush1.bf16.msra.mxu0 %v584
        %630 = vmatprep.subr.bf16.mxu0 0
        %631 = vmatpush1.bf16.msra.mxu0 %v585
        %632 = vmatprep.subr.bf16.mxu0 0
        %633 = vmatpush1.bf16.msra.mxu0 %v586
        %634 = vmatprep.subr.bf16.mxu0 0
        %635 = vmatpush1.bf16.msra.mxu0 %v587
        %636 = vmatprep.mubr.bf16.mxu0 %v445
        %637 = vmatmul.mubr.bf16.gmra.mrb[0].mxu0 %v444
        %v638 = vpop.f32.mrb[0].mxu0
        %v639 = vadd.f32 0.0, %v638
        %v640 = vpop.f32.mrb[0].mxu0
        %v641 = vpop.f32.mrb[0].mxu0
        %v642 = vadd.f32 0.0, %v641
        %v643 = vpop.f32.mrb[0].mxu0
        %644 = vmatprep.mubr.bf16.mxu0 %v447
        %645 = vmatmul.mubr.bf16.gmra.mrb[0].mxu0 %v446
        %v646 = vpop.f32.mrb[0].mxu0
        %v647 = vadd.f32 0.0, %v646
        %v648 = vpop.f32.mrb[0].mxu0
        %v649 = vpop.f32.mrb[0].mxu0
        %v650 = vadd.f32 0.0, %v649
        %v651 = vpop.f32.mrb[0].mxu0
        %652 = vmatprep.mubr.bf16.mxu0 %v449
        %653 = vmatmul.mubr.bf16.gmra.mrb[0].mxu0 %v448
        %v654 = vpop.f32.mrb[0].mxu0
        %v655 = vadd.f32 0.0, %v654
        %v656 = vpop.f32.mrb[0].mxu0
        %v657 = vpop.f32.mrb[0].mxu0
        %v658 = vadd.f32 0.0, %v657
        %v659 = vpop.f32.mrb[0].mxu0
        %660 = vmatprep.mubr.bf16.mxu0 %v451
        %661 = vmatmul.mubr.bf16.gmra.mrb[0].mxu0 %v450
        %v662 = vpop.f32.mrb[0].mxu0
        %v663 = vadd.f32 0.0, %v662
        %v664 = vpop.f32.mrb[0].mxu0
        %v665 = vpop.f32.mrb[0].mxu0
        %v666 = vadd.f32 0.0, %v665
        %v667 = vpop.f32.mrb[0].mxu0
        %668 = vmatprep.mubr.bf16.mxu0 %v453
        %669 = vmatmul.mubr.bf16.gmra.mrb[0].mxu0 %v452
        %v670 = vpop.f32.mrb[0].mxu0
        %v671 = vadd.f32 0.0, %v670
        %v672 = vpop.f32.mrb[0].mxu0
        %v673 = vpop.f32.mrb[0].mxu0
        %v674 = vadd.f32 0.0, %v673
        %v675 = vpop.f32.mrb[0].mxu0
        %676 = vmatprep.mubr.bf16.mxu0 %v455
        %677 = vmatmul.mubr.bf16.gmra.mrb[0].mxu0 %v454
        %v678 = vpop.f32.mrb[0].mxu0
        %v679 = vadd.f32 0.0, %v678
        %v680 = vpop.f32.mrb[0].mxu0
        %v681 = vpop.f32.mrb[0].mxu0
        %v682 = vadd.f32 0.0, %v681
        %v683 = vpop.f32.mrb[0].mxu0
        %684 = vmatprep.mubr.bf16.mxu0 %v457
        %685 = vmatmul.mubr.bf16.gmra.mrb[0].mxu0 %v456
        %v686 = vpop.f32.mrb[0].mxu0
        %v687 = vadd.f32 0.0, %v686
        %v688 = vpop.f32.mrb[0].mxu0
        %v689 = vpop.f32.mrb[0].mxu0
        %v690 = vadd.f32 0.0, %v689
        %v691 = vpop.f32.mrb[0].mxu0
        %692 = vmatprep.mubr.bf16.mxu0 %v459
        %693 = vmatmul.mubr.bf16.gmra.mrb[0].mxu0 %v458
        %v694 = vpop.f32.mrb[0].mxu0
        %v695 = vadd.f32 0.0, %v694
        %v696 = vpop.f32.mrb[0].mxu0
        %v697 = vpop.f32.mrb[0].mxu0
        %v698 = vadd.f32 0.0, %v697
        %v699 = vpop.f32.mrb[0].mxu0
        %700 = vmatprep.mubr.bf16.mxu0 %v461
        %701 = vmatmul.mubr.bf16.gmra.mrb[0].mxu0 %v460
        %v702 = vpop.f32.mrb[0].mxu0
        %v703 = vadd.f32 0.0, %v702
        %v704 = vpop.f32.mrb[0].mxu0
        %v705 = vpop.f32.mrb[0].mxu0
        %v706 = vadd.f32 0.0, %v705
        %v707 = vpop.f32.mrb[0].mxu0
        %708 = vmatprep.mubr.bf16.mxu0 %v463
        %709 = vmatmul.mubr.bf16.gmra.mrb[0].mxu0 %v462
        %v710 = vpop.f32.mrb[0].mxu0
        %v711 = vadd.f32 0.0, %v710
        %v712 = vpop.f32.mrb[0].mxu0
        %v713 = vpop.f32.mrb[0].mxu0
        %v714 = vadd.f32 0.0, %v713
        %v715 = vpop.f32.mrb[0].mxu0
        %716 = vmatprep.mubr.bf16.mxu0 %v465
        %717 = vmatmul.mubr.bf16.gmra.mrb[0].mxu0 %v464
        %v718 = vpop.f32.mrb[0].mxu0
        %v719 = vadd.f32 0.0, %v718
        %v720 = vpop.f32.mrb[0].mxu0
        %v721 = vpop.f32.mrb[0].mxu0
        %v722 = vadd.f32 0.0, %v721
        %v723 = vpop.f32.mrb[0].mxu0
        %724 = vmatprep.mubr.bf16.mxu0 %v467
        %725 = vmatmul.mubr.bf16.gmra.mrb[0].mxu0 %v466
        %v726 = vpop.f32.mrb[0].mxu0
        %v727 = vadd.f32 0.0, %v726
        %v728 = vpop.f32.mrb[0].mxu0
        %v729 = vpop.f32.mrb[0].mxu0
        %v730 = vadd.f32 0.0, %v729
        %v731 = vpop.f32.mrb[0].mxu0
        %732 = vmatprep.mubr.bf16.mxu0 %v469
        %733 = vmatmul.mubr.bf16.gmra.mrb[0].mxu0 %v468
        %v734 = vpop.f32.mrb[0].mxu0
        %v735 = vadd.f32 0.0, %v734
        %v736 = vpop.f32.mrb[0].mxu0
        %v737 = vpop.f32.mrb[0].mxu0
        %v738 = vadd.f32 0.0, %v737
        %v739 = vpop.f32.mrb[0].mxu0
        %740 = vmatprep.mubr.bf16.mxu0 %v471
        %741 = vmatmul.mubr.bf16.gmra.mrb[0].mxu0 %v470
        %v742 = vpop.f32.mrb[0].mxu0
        %v743 = vadd.f32 0.0, %v742
        %v744 = vpop.f32.mrb[0].mxu0
        %v745 = vpop.f32.mrb[0].mxu0
        %v746 = vadd.f32 0.0, %v745
        %v747 = vpop.f32.mrb[0].mxu0
        %748 = vmatprep.mubr.bf16.mxu0 %v473
        %749 = vmatmul.mubr.bf16.gmra.mrb[0].mxu0 %v472
        %v750 = vpop.f32.mrb[0].mxu0
        %v751 = vadd.f32 0.0, %v750
        %v752 = vpop.f32.mrb[0].mxu0
        %v753 = vpop.f32.mrb[0].mxu0
        %v754 = vadd.f32 0.0, %v753
        %v755 = vpop.f32.mrb[0].mxu0
        %756 = vmatprep.mubr.bf16.mxu0 %v475
        %757 = vmatmul.mubr.bf16.gmra.mrb[0].mxu0 %v474
        %v758 = vpop.f32.mrb[0].mxu0
        %v759 = vadd.f32 0.0, %v758
        %v760 = vpop.f32.mrb[0].mxu0
        %v761 = vpop.f32.mrb[0].mxu0
        %v762 = vadd.f32 0.0, %v761
        %v763 = vpop.f32.mrb[0].mxu0
        %764 = vdwg.mxu0
        %v765 = vld [vmem:[%s278] sm:$0x1]
        %v767 = vlaneseq
        %v768 = vshrl.u32 %v767, 7
        %v769 = vsub.s32 0, %v768
        %v770 = vrot.slane %v765, %v769
        %v772 = vmul.f32 %v639, %v770
        %v773 = vmul.f32 %v642, %v770
        %v774 = vmul.f32 %v647, %v770
        %v775 = vmul.f32 %v650, %v770
        %v776 = vmul.f32 %v655, %v770
        %v777 = vmul.f32 %v658, %v770
        %v778 = vmul.f32 %v663, %v770
        %v779 = vmul.f32 %v666, %v770
        %v780 = vmul.f32 %v671, %v770
        %v781 = vmul.f32 %v674, %v770
        %v782 = vmul.f32 %v679, %v770
        %v783 = vmul.f32 %v682, %v770
        %v784 = vmul.f32 %v687, %v770
        %v785 = vmul.f32 %v690, %v770
        %v786 = vmul.f32 %v695, %v770
        %v787 = vmul.f32 %v698, %v770
        %v788 = vmul.f32 %v703, %v770
        %v789 = vmul.f32 %v706, %v770
        %v790 = vmul.f32 %v711, %v770
        %v791 = vmul.f32 %v714, %v770
        %v792 = vmul.f32 %v719, %v770
        %v793 = vmul.f32 %v722, %v770
        %v794 = vmul.f32 %v727, %v770
        %v795 = vmul.f32 %v730, %v770
        %v796 = vmul.f32 %v735, %v770
        %v797 = vmul.f32 %v738, %v770
        %v798 = vmul.f32 %v743, %v770
        %v799 = vmul.f32 %v746, %v770
        %v800 = vmul.f32 %v751, %v770
        %v801 = vmul.f32 %v754, %v770
        %v802 = vmul.f32 %v759, %v770
        %v803 = vmul.f32 %v762, %v770
        %v804 = vld [vmem:[%s281] sm:$0x1]
        %v806 = vlaneseq
        %v807 = vshrl.u32 %v806, 7
        %v808 = vsub.s32 0, %v807
        %v809 = vrot.slane %v804, %v808
        %v811 = vadd.f32 %v772, %v809
        %v812 = vadd.f32 %v773, %v809
        %v813 = vadd.f32 %v774, %v809
        %v814 = vadd.f32 %v775, %v809
        %v815 = vadd.f32 %v776, %v809
        %v816 = vadd.f32 %v777, %v809
        %v817 = vadd.f32 %v778, %v809
        %v818 = vadd.f32 %v779, %v809
        %v819 = vadd.f32 %v780, %v809
        %v820 = vadd.f32 %v781, %v809
        %v821 = vadd.f32 %v782, %v809
        %v822 = vadd.f32 %v783, %v809
        %v823 = vadd.f32 %v784, %v809
        %v824 = vadd.f32 %v785, %v809
        %v825 = vadd.f32 %v786, %v809
        %v826 = vadd.f32 %v787, %v809
        %v827 = vadd.f32 %v788, %v809
        %v828 = vadd.f32 %v789, %v809
        %v829 = vadd.f32 %v790, %v809
        %v830 = vadd.f32 %v791, %v809
        %v831 = vadd.f32 %v792, %v809
        %v832 = vadd.f32 %v793, %v809
        %v833 = vadd.f32 %v794, %v809
        %v834 = vadd.f32 %v795, %v809
        %v835 = vadd.f32 %v796, %v809
        %v836 = vadd.f32 %v797, %v809
        %v837 = vadd.f32 %v798, %v809
        %v838 = vadd.f32 %v799, %v809
        %v839 = vadd.f32 %v800, %v809
        %v840 = vadd.f32 %v801, %v809
        %v841 = vadd.f32 %v802, %v809
        %v842 = vadd.f32 %v803, %v809
        %v843 = vmax.f32 %v811, 0.0
        %v844 = vmax.f32 %v812, 0.0
        %v845 = vmax.f32 %v813, 0.0
        %v846 = vmax.f32 %v814, 0.0
        %v847 = vmax.f32 %v815, 0.0
        %v848 = vmax.f32 %v816, 0.0
        %v849 = vmax.f32 %v817, 0.0
        %v850 = vmax.f32 %v818, 0.0
        %v851 = vmax.f32 %v819, 0.0
        %v852 = vmax.f32 %v820, 0.0
        %v853 = vmax.f32 %v821, 0.0
        %v854 = vmax.f32 %v822, 0.0
        %v855 = vmax.f32 %v823, 0.0
        %v856 = vmax.f32 %v824, 0.0
        %v857 = vmax.f32 %v825, 0.0
        %v858 = vmax.f32 %v826, 0.0
        %v859 = vmax.f32 %v827, 0.0
        %v860 = vmax.f32 %v828, 0.0
        %v861 = vmax.f32 %v829, 0.0
        %v862 = vmax.f32 %v830, 0.0
        %v863 = vmax.f32 %v831, 0.0
        %v864 = vmax.f32 %v832, 0.0
        %v865 = vmax.f32 %v833, 0.0
        %v866 = vmax.f32 %v834, 0.0
        %v867 = vmax.f32 %v835, 0.0
        %v868 = vmax.f32 %v836, 0.0
        %v869 = vmax.f32 %v837, 0.0
        %v870 = vmax.f32 %v838, 0.0
        %v871 = vmax.f32 %v839, 0.0
        %v872 = vmax.f32 %v840, 0.0
        %v873 = vmax.f32 %v841, 0.0
        %v874 = vmax.f32 %v842, 0.0
        %v875 = vpack.c.bf16 %v844, %v843
        %v876 = vpack.c.bf16 %v846, %v845
        %v877 = vpack.c.bf16 %v848, %v847
        %v878 = vpack.c.bf16 %v850, %v849
        %v879 = vpack.c.bf16 %v852, %v851
        %v880 = vpack.c.bf16 %v854, %v853
        %v881 = vpack.c.bf16 %v856, %v855
        %v882 = vpack.c.bf16 %v858, %v857
        %v883 = vpack.c.bf16 %v860, %v859
        %v884 = vpack.c.bf16 %v862, %v861
        %v885 = vpack.c.bf16 %v864, %v863
        %v886 = vpack.c.bf16 %v866, %v865
        %v887 = vpack.c.bf16 %v868, %v867
        %v888 = vpack.c.bf16 %v870, %v869
        %v889 = vpack.c.bf16 %v872, %v871
        %v890 = vpack.c.bf16 %v874, %v873
        %v907 = vunpack.c.l.b16 %v875
        %v908 = vunpack.c.h.b16 %v875
        %v909 = vunpack.c.l.b16 %v876
        %v910 = vunpack.c.h.b16 %v876
        %v911 = vunpack.c.l.b16 %v877
        %v912 = vunpack.c.h.b16 %v877
        %v913 = vunpack.c.l.b16 %v878
        %v914 = vunpack.c.h.b16 %v878
        %v915 = vunpack.c.l.b16 %v879
        %v916 = vunpack.c.h.b16 %v879
        %v917 = vunpack.c.l.b16 %v880
        %v918 = vunpack.c.h.b16 %v880
        %v919 = vunpack.c.l.b16 %v881
        %v920 = vunpack.c.h.b16 %v881
        %v921 = vunpack.c.l.b16 %v882
        %v922 = vunpack.c.h.b16 %v882
        %v923 = vunpack.c.l.b16 %v883
        %v924 = vunpack.c.h.b16 %v883
        %v925 = vunpack.c.l.b16 %v884
        %v926 = vunpack.c.h.b16 %v884
        %v927 = vunpack.c.l.b16 %v885
        %v928 = vunpack.c.h.b16 %v885
        %v929 = vunpack.c.l.b16 %v886
        %v930 = vunpack.c.h.b16 %v886
        %v931 = vunpack.c.l.b16 %v887
        %v932 = vunpack.c.h.b16 %v887
        %v933 = vunpack.c.l.b16 %v888
        %v934 = vunpack.c.h.b16 %v888
        %v935 = vunpack.c.l.b16 %v889
        %v936 = vunpack.c.h.b16 %v889
        %v937 = vunpack.c.l.b16 %v890
        %v938 = vunpack.c.h.b16 %v890
        %v939 = vpack.c.b16 %v907, %v907
        %v940 = vpack.c.b16 %v908, %v908
        %v941 = vpack.c.b16 %v909, %v909
        %v942 = vpack.c.b16 %v910, %v910
        %v943 = vpack.c.b16 %v911, %v911
        %v944 = vpack.c.b16 %v912, %v912
        %v945 = vpack.c.b16 %v913, %v913
        %v946 = vpack.c.b16 %v914, %v914
        %v947 = vpack.c.b16 %v915, %v915
        %v948 = vpack.c.b16 %v916, %v916
        %v949 = vpack.c.b16 %v917, %v917
        %v950 = vpack.c.b16 %v918, %v918
        %v951 = vpack.c.b16 %v919, %v919
        %v952 = vpack.c.b16 %v920, %v920
        %v953 = vpack.c.b16 %v921, %v921
        %v954 = vpack.c.b16 %v922, %v922
        %v955 = vpack.c.b16 %v923, %v923
        %v956 = vpack.c.b16 %v924, %v924
        %v957 = vpack.c.b16 %v925, %v925
        %v958 = vpack.c.b16 %v926, %v926
        %v959 = vpack.c.b16 %v927, %v927
        %v960 = vpack.c.b16 %v928, %v928
        %v961 = vpack.c.b16 %v929, %v929
        %v962 = vpack.c.b16 %v930, %v930
        %v963 = vpack.c.b16 %v931, %v931
        %v964 = vpack.c.b16 %v932, %v932
        %v965 = vpack.c.b16 %v933, %v933
        %v966 = vpack.c.b16 %v934, %v934
        %v967 = vpack.c.b16 %v935, %v935
        %v968 = vpack.c.b16 %v936, %v936
        %v969 = vpack.c.b16 %v937, %v937
        %v970 = vpack.c.b16 %v938, %v938
        %1003 = vst [vmem:[%s274] sm:$0xf] %v939
        %1004 = vst [vmem:[%s274 + $0x4] sm:$0xf] %v940
        %1005 = vst [vmem:[%s274 + $0x8] sm:$0xf] %v941
        %1006 = vst [vmem:[%s274 + $0xc] sm:$0xf] %v942
        %1007 = vst [vmem:[%s274 + $0x10] sm:$0xf] %v943
        %1008 = vst [vmem:[%s274 + $0x14] sm:$0xf] %v944
        %1009 = vst [vmem:[%s274 + $0x18] sm:$0xf] %v945
        %1010 = vst [vmem:[%s274 + $0x1c] sm:$0xf] %v946
        %1011 = vst [vmem:[%s274 + $0x20] sm:$0xf] %v947
        %1012 = vst [vmem:[%s274 + $0x24] sm:$0xf] %v948
        %1013 = vst [vmem:[%s274 + $0x28] sm:$0xf] %v949
        %1014 = vst [vmem:[%s274 + $0x2c] sm:$0xf] %v950
        %1015 = vst [vmem:[%s274 + $0x30] sm:$0xf] %v951
        %1016 = vst [vmem:[%s274 + $0x34] sm:$0xf] %v952
        %1017 = vst [vmem:[%s274 + $0x38] sm:$0xf] %v953
        %1018 = vst [vmem:[%s274 + $0x3c] sm:$0xf] %v954
        %1019 = vst [vmem:[%s274 + $0x40] sm:$0xf] %v955
        %1020 = vst [vmem:[%s274 + $0x44] sm:$0xf] %v956
        %1021 = vst [vmem:[%s274 + $0x48] sm:$0xf] %v957
        %1022 = vst [vmem:[%s274 + $0x4c] sm:$0xf] %v958
        %1023 = vst [vmem:[%s274 + $0x50] sm:$0xf] %v959
        %1024 = vst [vmem:[%s274 + $0x54] sm:$0xf] %v960
        %1025 = vst [vmem:[%s274 + $0x58] sm:$0xf] %v961
        %1026 = vst [vmem:[%s274 + $0x5c] sm:$0xf] %v962
        %1027 = vst [vmem:[%s274 + $0x60] sm:$0xf] %v963
        %1028 = vst [vmem:[%s274 + $0x64] sm:$0xf] %v964
        %1029 = vst [vmem:[%s274 + $0x68] sm:$0xf] %v965
        %1030 = vst [vmem:[%s274 + $0x6c] sm:$0xf] %v966
        %1031 = vst [vmem:[%s274 + $0x70] sm:$0xf] %v967
        %1032 = vst [vmem:[%s274 + $0x74] sm:$0xf] %v968
        %1033 = vst [vmem:[%s274 + $0x78] sm:$0xf] %v969
        %1034 = vst [vmem:[%s274 + $0x7c] sm:$0xf] %v970
        %s1035 = sand.u32 %s148, 1
        %s1036 = scalar_lea.sflag [#allocation4], %s1035
        %s1037 = sand.u32 %s148, 1
        %s1038 = smul.addr %s1037, 128
        %s1039 = scalar_lea.vmem [#allocation7], %s1038
        // Predicated region
        $region45: #{tpu_custom_call.1} parent=35 // pred_check
          %p1040 = pneg %p158
        $region46: #{tpu_custom_call.1} parent=35 // pred_check_branch
          %1042 = sbr.rel (%p1040) target = $region48
        $region47: #{tpu_custom_call.1} parent=35 // pred_region
          %s1043 = smul.u32 32, %s26
          %s1045 = ssub.s32 2048, 2048
          %1046 = vsyncadd %s1036, %s1045
          %s1047 = sadd.s32 %s27, %s1043
          %s1048 = smul.addr %s1047, 64
          %s1049 = scalar_lea.hbm %s4, %s1048
          %s1050 = sshll.u32 %s1039, 4
          %s1051 = int_to_ptr.vmem [resolvable:$true] %s1050
          %1056 = dma.vmem_to_hbm [thread:$0]  %s1051, 2048, %s1049, %s1036, 64, 64, 4
        $region48: #{tpu_custom_call.1} parent=35 // pred_fallthru
          _
      $region36: #{tpu_custom_call.1} parent=5 // pred_fallthru
        _
      %p1057 = scmp.le.s32.totalorder 2, %s17
      // Predicated region
      $region49: #{tpu_custom_call.1} parent=5 // pred_check
        %p1058 = pneg %p1057
      $region50: #{tpu_custom_call.1} parent=5 // pred_check_branch
        %1060 = sbr.rel (%p1058) target = $region52
      $region51: #{tpu_custom_call.1} parent=5 // pred_region
        %s1061 = ssub.s32 %s17, 2
        // Predicated region
        $region53: #{tpu_custom_call.1} parent=51 // pred_check
          %p1062 = pneg %p164
        $region54: #{tpu_custom_call.1} parent=51 // pred_check_branch
          %1064 = sbr.rel (%p1062) target = $region56
        $region55: #{tpu_custom_call.1} parent=51 // pred_region
          %s1065 = sand.u32 %s149, 1
          %s1066 = scalar_lea.sflag [#allocation4], %s1065
          %s1067 = sand.u32 %s149, 1
          %s1068 = smul.addr %s1067, 128
          %s1069 = scalar_lea.vmem [#allocation7], %s1068
          %1070 = dma.done %s1066, 2048
        $region56: #{tpu_custom_call.1} parent=51 // pred_fallthru
          _
      $region52: #{tpu_custom_call.1} parent=5 // pred_fallthru
        _
    $region6: #{tpu_custom_call.1} parent=1 // loop_footer
      %s21 = sadd.s32 1, %s17
    $region7: #{tpu_custom_call.1} parent=1 // loop_footer_branch
      %16 = sbr.rel target = $region3
    $region8: #{tpu_custom_call.1} parent=1 // loop_exit
      _
    %1071 = vsyncpa [#allocation3], 1
    %s1072 = scalar_lea.sflag [#allocation3], 1
    %1073 = vsyncpa %s1072, 1
    %1074 = vsyncpa [#allocation6], 1
    %1075 = vsyncpa [#allocation4], 1
    %s1076 = scalar_lea.sflag [#allocation4], 1
    %1077 = vsyncpa %s1076, 1

</llo_original>
